<compile_context>
chip_gen: v7x
topology: tpu7x:2x2x1
jax: 0.10.0
libtpu: 0.0.40
codegen_flags: <defaults>
</compile_context>

<pallas_src>
import jax
import jax.numpy as jnp
from jax.experimental import pallas as pl
from jax.experimental.pallas import tpu as pltpu

EPS = 1e-5


def make_residual_block_kernel(B, H, W, C):
    WC = W * C
    BH = B * H
    inv_n = 1.0 / float(B * H * W)

    def kernel(x_ref, w1_ref, w2_ref, gb_ref, o_ref, xp_ref):
        # x_ref  : (B, H, W*C)    f32  lane-dense NHWC activation (read once)
        # w*_ref : (3, W*C, W*C)  bf16 block-banded tap weights (one per ky)
        # gb_ref : (4, W*C)       f32  [gamma1, beta1, gamma2, beta2], W-tiled
        # o_ref  : (B*H, W*C)     f32  lane-dense output
        # xp_ref : (B, H+2, W*C)  f32  VMEM scratch with a 1-row vertical halo
        # TODO(synk): keep xp_ref in bf16 (it is only ever an MXU operand)
        # once unaligned packed-sublane stores are verified on all targets;
        # at this size the f32 scratch costs <0.15 MiB.

        # Zero only the halo rows (top / bottom row of every image).
        xp_ref[:, 0:1, :] = jnp.zeros((B, 1, WC), jnp.float32)
        xp_ref[:, H + 1:H + 2, :] = jnp.zeros((B, 1, WC), jnp.float32)

        x = x_ref[...]                      # (B, H, WC) f32 — single HBM read
        xp_ref[:, 1:H + 1, :] = x           # interior write (halo stays zero)

        def conv3x3(w_ref):
            # Three lane-dense MXU matmuls (K = N = W*C), f32 accumulation.
            acc = None
            for ky in range(3):
                tap = xp_ref[:, ky:ky + H, :].reshape(BH, WC)
                tap = tap.astype(jnp.bfloat16)
                p = jnp.dot(tap, w_ref[ky], preferred_element_type=jnp.float32)
                acc = p if acc is None else acc + p
            return acc                       # (B*H, W*Cout) f32

        def fold_w(v):
            # (1, WC) column sums -> per-channel sums replicated across the W
            # lane groups.  Cyclic lane fold on the XLU; direction-agnostic.
            shift = WC // 2
            while shift >= C:
                v = v + pltpu.roll(v, shift, axis=1)
                shift //= 2
            return v

        def batch_norm(t, g_row, be_row):
            # Training-mode BN, biased variance, fused single pass.
            # TODO(synk): use Welford / a centered second pass at production
            # scale (E[x^2]-mean^2 can cancel badly in f32).
            s = fold_w(jnp.sum(t, axis=0, keepdims=True))
            ss = fold_w(jnp.sum(t * t, axis=0, keepdims=True))
            mean = s * inv_n
            var = ss * inv_n - mean * mean
            scale = g_row * jax.lax.rsqrt(var + EPS)
            shift = be_row - mean * scale
            return t * scale + shift

        g1, be1 = gb_ref[0:1, :], gb_ref[1:2, :]
        g2, be2 = gb_ref[2:3, :], gb_ref[3:4, :]

        # conv1 -> bn1 -> relu   (conv bias omitted: cancelled by train-mode BN)
        y = jnp.maximum(batch_norm(conv3x3(w1_ref), g1, be1), 0.0)

        # Reuse the scratch for conv2's operand; the halo is still zero.
        xp_ref[:, 1:H + 1, :] = y.reshape(B, H, WC)

        # conv2 -> bn2 -> residual add -> relu, all lane-dense.
        z = batch_norm(conv3x3(w2_ref), g2, be2)
        o_ref[...] = jnp.maximum(z + x.reshape(BH, WC), 0.0).astype(o_ref.dtype)

    return kernel


def _banded_weights(w, W):
    """(Cout, Cin, 3, 3) conv weight -> (3, W*Cin, W*Cout) bf16.

    mats[ky] = sum_kx kron(eye(W, k=-(kx-1)), w[:, :, ky, kx].T), a block-banded
    matrix so that (B*H, W*Cin) @ mats[ky] applies all three horizontal taps of
    vertical offset ky with implicit zero padding at w=0 / w=W-1.
    """
    mats = []
    for ky in range(3):
        m = jnp.zeros((W * w.shape[1], W * w.shape[0]), jnp.float32)
        for kx in range(3):
            tap = jnp.transpose(w[:, :, ky, kx]).astype(jnp.float32)   # (Cin, Cout)
            band = jnp.eye(W, k=-(kx - 1), dtype=jnp.float32)          # w_in = w_out + kx - 1
            m = m + jnp.kron(band, tap)
        mats.append(m)
    return jnp.stack(mats).astype(jnp.bfloat16)


def residual_block(x_nchw, params):
    """x_nchw: (B, C, H, W) float32. Returns (B, C, H, W)."""
    B, Cin, H, W = x_nchw.shape
    Cout = params["w1"].shape[0]
    assert Cin == Cout, "residual add requires in_channels == out_channels"
    assert W & (W - 1) == 0, "lane-fold BN reduction assumes W is a power of two"
    WC = W * Cin

    # Single HBM-resident activation: NCHW -> NHWC -> lane-dense (B, H, W*C).
    x_lane = (jnp.transpose(x_nchw, (0, 2, 3, 1))
              .reshape(B, H, WC).astype(jnp.float32))

    w1 = _banded_weights(params["w1"], W)
    w2 = _banded_weights(params["w2"], W)
    gb = jnp.stack([jnp.tile(params["g1"], W), jnp.tile(params["be1"], W),
                    jnp.tile(params["g2"], W), jnp.tile(params["be2"], W)]
                   ).astype(jnp.float32)

    flops = 2 * 3 * 2 * (B * H) * WC * WC                 # 6 banded MXU matmuls
    bytes_accessed = ((x_lane.size + B * H * WC + gb.size) * 4
                      + (w1.size + w2.size) * 2)
    vmem = pl.BlockSpec(memory_space=pltpu.MemorySpace.VMEM)

    # TODO(synk): for production-sized B/H/W/C this becomes a tiled, grid-based
    # two-pass scheme (pass 1: conv1 + per-channel sum/sumsq over an
    # 'arbitrary' axis; pass 2: normalize + conv2 + residual) with 'parallel'
    # spatial axes for v7x's 2 TensorCores, bf16 MXU-side buffers, and tiles
    # sized for 64 MiB (v7x) / raised vmem_limit_bytes (v5e/v6e).  At this test
    # size the whole problem is <0.3 MiB, so one fused VMEM block is optimal.
    out2d = pl.pallas_call(
        make_residual_block_kernel(B, H, W, Cin),
        out_shape=jax.ShapeDtypeStruct((B * H, W * Cout), x_nchw.dtype),
        in_specs=[vmem, vmem, vmem, vmem],
        out_specs=vmem,
        scratch_shapes=[pltpu.VMEM((B, H + 2, WC), jnp.float32)],
        cost_estimate=pl.CostEstimate(flops=flops, transcendentals=2 * WC,
                                      bytes_accessed=bytes_accessed),
    )(x_lane, w1, w2, gb)

    out_nhwc = out2d.reshape(B, H, W, Cout)
    return jnp.transpose(out_nhwc, (0, 3, 1, 2))          # back to NCHW


def residual_block_reference(x, p, conv_dtype=jnp.float32):
    """Pure-JAX NCHW reference matching PyTorch train-mode BN.

    conv_dtype=jnp.bfloat16 mirrors the kernel's MXU precision (bf16 operands,
    f32 accumulation) for a tight structural comparison.
    """
    def conv(t, w, b):
        y = jax.lax.conv_general_dilated(
            t.astype(conv_dtype), w.astype(conv_dtype),
            window_strides=(1, 1), padding=((1, 1), (1, 1)),
            dimension_numbers=("NCHW", "OIHW", "NCHW"),
            preferred_element_type=jnp.float32)
        return y + b.reshape(1, -1, 1, 1)

    def bn(t, g, be):
        mean = jnp.mean(t, axis=(0, 2, 3), keepdims=True)
        var = jnp.mean((t - mean) ** 2, axis=(0, 2, 3), keepdims=True)
        return ((t - mean) * jax.lax.rsqrt(var + EPS)
                * g.reshape(1, -1, 1, 1) + be.reshape(1, -1, 1, 1))

    y = jnp.maximum(bn(conv(x, p["w1"], p["b1"]), p["g1"], p["be1"]), 0.0)
    z = bn(conv(y, p["w2"], p["b2"]), p["g2"], p["be2"])
    return jnp.maximum(z + x, 0.0)


if __name__ == "__main__":
    B, C, H, W = 2, 8, 16, 16   # in_channels == out_channels == 8; W*C = 128 lanes

    key = jax.random.PRNGKey(0)
    k1, k2, k3, k4, kx = jax.random.split(key, 5)
    params = {
        "w1": 0.1 * jax.random.normal(k1, (C, C, 3, 3), jnp.float32),
        "b1": 0.1 * jax.random.normal(k2, (C,), jnp.float32),
        "g1": jnp.ones((C,), jnp.float32),
        "be1": jnp.zeros((C,), jnp.float32),
        "w2": 0.1 * jax.random.normal(k3, (C, C, 3, 3), jnp.float32),
        "b2": 0.1 * jax.random.normal(k4, (C,), jnp.float32),
        "g2": jnp.ones((C,), jnp.float32),
        "be2": jnp.zeros((C,), jnp.float32),
    }
    x = jax.random.normal(kx, (B, C, H, W), jnp.float32)

    out = jax.block_until_ready(residual_block(x, params))
    assert out.shape == (B, C, H, W)

    # Tight check vs. a reference with the same MXU precision (bf16 operands,
    # f32 accumulation / BN / elementwise).
    ref_bf16 = jax.block_until_ready(
        residual_block_reference(x, params, conv_dtype=jnp.bfloat16))
    assert jnp.allclose(out, ref_bf16, atol=1e-2, rtol=1e-2), (
        float(jnp.max(jnp.abs(out - ref_bf16))))

    # Looser check vs. the pure-f32 PyTorch-equivalent forward (bf16 MXU
    # inputs introduce ~1e-2-level quantization, as expected on TPU).
    ref_f32 = jax.block_until_ready(
        residual_block_reference(x, params, conv_dtype=jnp.float32))
    assert jnp.allclose(out, ref_f32, atol=5e-2, rtol=5e-2), (
        float(jnp.max(jnp.abs(out - ref_f32))))

    print("KERNEL_OK")
</pallas_src>

<mosaic_0001>
module attributes {stable_mosaic.version = 11 : i64} {
  func.func @kernel(%arg0: memref<2x16x128xf32, #tpu.memory_space<vmem>>, %arg1: memref<3x128x128xbf16, #tpu.memory_space<vmem>>, %arg2: memref<3x128x128xbf16, #tpu.memory_space<vmem>>, %arg3: memref<4x128xf32, #tpu.memory_space<vmem>>, %arg4: memref<32x128xf32, #tpu.memory_space<vmem>>, %arg5: memref<2x18x128xf32, #tpu.memory_space<vmem>>) attributes {dimension_semantics = [], scalar_prefetch = 0 : i64, scratch_operands = 1 : i64, tpu.core_type = #tpu.core_type<tc>} {
    %cst = arith.constant 0.000000e+00 : f32
    %0 = vector.broadcast %cst : f32 to vector<2x1x128xf32>
    %c0 = arith.constant 0 : index
    %c0_0 = arith.constant 0 : index
    %c0_1 = arith.constant 0 : index
    %1 = vector.load %arg5[%c0, %c0_0, %c0_1] : memref<2x18x128xf32, #tpu.memory_space<vmem>>, vector<2x1x128xf32>
    tpu.vector_store %arg5[%c0, %c0_0, %c0_1], %0 {strides = array<i32>} : memref<2x18x128xf32, #tpu.memory_space<vmem>>, vector<2x1x128xf32>,
    %cst_2 = arith.constant 0.000000e+00 : f32
    %2 = vector.broadcast %cst_2 : f32 to vector<2x1x128xf32>
    %c0_3 = arith.constant 0 : index
    %c17 = arith.constant 17 : index
    %c0_4 = arith.constant 0 : index
    %3 = vector.load %arg5[%c0_3, %c17, %c0_4] : memref<2x18x128xf32, #tpu.memory_space<vmem>>, vector<2x1x128xf32>
    tpu.vector_store %arg5[%c0_3, %c17, %c0_4], %2 {strides = array<i32>} : memref<2x18x128xf32, #tpu.memory_space<vmem>>, vector<2x1x128xf32>,
    %c0_5 = arith.constant 0 : index
    %c0_6 = arith.constant 0 : index
    %c0_7 = arith.constant 0 : index
    %4 = vector.load %arg0[%c0_5, %c0_6, %c0_7] : memref<2x16x128xf32, #tpu.memory_space<vmem>>, vector<2x16x128xf32>
    %c0_8 = arith.constant 0 : index
    %c1 = arith.constant 1 : index
    %c0_9 = arith.constant 0 : index
    %5 = vector.load %arg5[%c0_8, %c1, %c0_9] : memref<2x18x128xf32, #tpu.memory_space<vmem>>, vector<2x16x128xf32>
    tpu.vector_store %arg5[%c0_8, %c1, %c0_9], %4 {strides = array<i32>} : memref<2x18x128xf32, #tpu.memory_space<vmem>>, vector<2x16x128xf32>,
    %c0_10 = arith.constant 0 : index
    %c0_11 = arith.constant 0 : index
    %6 = vector.load %arg3[%c0_10, %c0_11] : memref<4x128xf32, #tpu.memory_space<vmem>>, vector<1x128xf32>
    %c1_12 = arith.constant 1 : index
    %c0_13 = arith.constant 0 : index
    %7 = vector.load %arg3[%c1_12, %c0_13] : memref<4x128xf32, #tpu.memory_space<vmem>>, vector<1x128xf32>
    %c2 = arith.constant 2 : index
    %c0_14 = arith.constant 0 : index
    %8 = vector.load %arg3[%c2, %c0_14] : memref<4x128xf32, #tpu.memory_space<vmem>>, vector<1x128xf32>
    %c3 = arith.constant 3 : index
    %c0_15 = arith.constant 0 : index
    %9 = vector.load %arg3[%c3, %c0_15] : memref<4x128xf32, #tpu.memory_space<vmem>>, vector<1x128xf32>
    %c0_16 = arith.constant 0 : index
    %c0_17 = arith.constant 0 : index
    %c0_18 = arith.constant 0 : index
    %10 = vector.load %arg5[%c0_16, %c0_17, %c0_18] : memref<2x18x128xf32, #tpu.memory_space<vmem>>, vector<2x16x128xf32>
    %11 = vector.shape_cast %10 : vector<2x16x128xf32> to vector<32x128xf32>
    %12 = arith.truncf %11 : vector<32x128xf32> to vector<32x128xbf16>
    %c0_19 = arith.constant 0 : index
    %c0_20 = arith.constant 0 : index
    %c0_21 = arith.constant 0 : index
    %13 = vector.load %arg1[%c0_19, %c0_20, %c0_21] : memref<3x128x128xbf16, #tpu.memory_space<vmem>>, vector<1x128x128xbf16>
    %14 = vector.shape_cast %13 : vector<1x128x128xbf16> to vector<128x128xbf16>
    %cst_22 = arith.constant dense<0.000000e+00> : vector<32x128xf32>
    %15 = tpu.matmul %12, %14, %cst_22 {dimension_numbers = #tpu.dot_dimension_numbers<[1], [0], [0], [1], [0, 0, 1, 1], [], []>} : vector<32x128xbf16>, vector<128x128xbf16>, vector<32x128xf32> -> vector<32x128xf32>
    %c0_23 = arith.constant 0 : index
    %c1_24 = arith.constant 1 : index
    %c0_25 = arith.constant 0 : index
    %16 = vector.load %arg5[%c0_23, %c1_24, %c0_25] : memref<2x18x128xf32, #tpu.memory_space<vmem>>, vector<2x16x128xf32>
    %17 = vector.shape_cast %16 : vector<2x16x128xf32> to vector<32x128xf32>
    %18 = arith.truncf %17 : vector<32x128xf32> to vector<32x128xbf16>
    %c1_26 = arith.constant 1 : index
    %c0_27 = arith.constant 0 : index
    %c0_28 = arith.constant 0 : index
    %19 = vector.load %arg1[%c1_26, %c0_27, %c0_28] : memref<3x128x128xbf16, #tpu.memory_space<vmem>>, vector<1x128x128xbf16>
    %20 = vector.shape_cast %19 : vector<1x128x128xbf16> to vector<128x128xbf16>
    %cst_29 = arith.constant dense<0.000000e+00> : vector<32x128xf32>
    %21 = tpu.matmul %18, %20, %cst_29 {dimension_numbers = #tpu.dot_dimension_numbers<[1], [0], [0], [1], [0, 0, 1, 1], [], []>} : vector<32x128xbf16>, vector<128x128xbf16>, vector<32x128xf32> -> vector<32x128xf32>
    %22 = arith.addf %15, %21 : vector<32x128xf32>
    %c0_30 = arith.constant 0 : index
    %c2_31 = arith.constant 2 : index
    %c0_32 = arith.constant 0 : index
    %23 = vector.load %arg5[%c0_30, %c2_31, %c0_32] : memref<2x18x128xf32, #tpu.memory_space<vmem>>, vector<2x16x128xf32>
    %24 = vector.shape_cast %23 : vector<2x16x128xf32> to vector<32x128xf32>
    %25 = arith.truncf %24 : vector<32x128xf32> to vector<32x128xbf16>
    %c2_33 = arith.constant 2 : index
    %c0_34 = arith.constant 0 : index
    %c0_35 = arith.constant 0 : index
    %26 = vector.load %arg1[%c2_33, %c0_34, %c0_35] : memref<3x128x128xbf16, #tpu.memory_space<vmem>>, vector<1x128x128xbf16>
    %27 = vector.shape_cast %26 : vector<1x128x128xbf16> to vector<128x128xbf16>
    %cst_36 = arith.constant dense<0.000000e+00> : vector<32x128xf32>
    %28 = tpu.matmul %25, %27, %cst_36 {dimension_numbers = #tpu.dot_dimension_numbers<[1], [0], [0], [1], [0, 0, 1, 1], [], []>} : vector<32x128xbf16>, vector<128x128xbf16>, vector<32x128xf32> -> vector<32x128xf32>
    %29 = arith.addf %22, %28 : vector<32x128xf32>
    %cst_37 = arith.constant dense<0.000000e+00> : vector<128xf32>
    %30 = vector.multi_reduction <add>, %29, %cst_37 [0] : vector<32x128xf32> to vector<128xf32>
    %31 = vector.shape_cast %30 : vector<128xf32> to vector<1x128xf32>
    %c64_i32 = arith.constant 64 : i32
    %32 = tpu.dynamic_rotate %31 by %c64_i32 dim 1 : vector<1x128xf32>, i32 -> vector<1x128xf32>
    %33 = arith.addf %31, %32 : vector<1x128xf32>
    %c32_i32 = arith.constant 32 : i32
    %34 = tpu.dynamic_rotate %33 by %c32_i32 dim 1 : vector<1x128xf32>, i32 -> vector<1x128xf32>
    %35 = arith.addf %33, %34 : vector<1x128xf32>
    %c16_i32 = arith.constant 16 : i32
    %36 = tpu.dynamic_rotate %35 by %c16_i32 dim 1 : vector<1x128xf32>, i32 -> vector<1x128xf32>
    %37 = arith.addf %35, %36 : vector<1x128xf32>
    %c8_i32 = arith.constant 8 : i32
    %38 = tpu.dynamic_rotate %37 by %c8_i32 dim 1 : vector<1x128xf32>, i32 -> vector<1x128xf32>
    %39 = arith.addf %37, %38 : vector<1x128xf32>
    %40 = arith.mulf %29, %29 : vector<32x128xf32>
    %cst_38 = arith.constant dense<0.000000e+00> : vector<128xf32>
    %41 = vector.multi_reduction <add>, %40, %cst_38 [0] : vector<32x128xf32> to vector<128xf32>
    %42 = vector.shape_cast %41 : vector<128xf32> to vector<1x128xf32>
    %c64_i32_39 = arith.constant 64 : i32
    %43 = tpu.dynamic_rotate %42 by %c64_i32_39 dim 1 : vector<1x128xf32>, i32 -> vector<1x128xf32>
    %44 = arith.addf %42, %43 : vector<1x128xf32>
    %c32_i32_40 = arith.constant 32 : i32
    %45 = tpu.dynamic_rotate %44 by %c32_i32_40 dim 1 : vector<1x128xf32>, i32 -> vector<1x128xf32>
    %46 = arith.addf %44, %45 : vector<1x128xf32>
    %c16_i32_41 = arith.constant 16 : i32
    %47 = tpu.dynamic_rotate %46 by %c16_i32_41 dim 1 : vector<1x128xf32>, i32 -> vector<1x128xf32>
    %48 = arith.addf %46, %47 : vector<1x128xf32>
    %c8_i32_42 = arith.constant 8 : i32
    %49 = tpu.dynamic_rotate %48 by %c8_i32_42 dim 1 : vector<1x128xf32>, i32 -> vector<1x128xf32>
    %50 = arith.addf %48, %49 : vector<1x128xf32>
    %cst_43 = arith.constant 0.001953125 : f32
    %51 = vector.broadcast %cst_43 : f32 to vector<1x128xf32>
    %52 = arith.mulf %39, %51 : vector<1x128xf32>
    %cst_44 = arith.constant 0.001953125 : f32
    %53 = vector.broadcast %cst_44 : f32 to vector<1x128xf32>
    %54 = arith.mulf %50, %53 : vector<1x128xf32>
    %55 = arith.mulf %52, %52 : vector<1x128xf32>
    %56 = arith.subf %54, %55 : vector<1x128xf32>
    %cst_45 = arith.constant 9.99999974E-6 : f32
    %57 = vector.broadcast %cst_45 : f32 to vector<1x128xf32>
    %58 = arith.addf %56, %57 : vector<1x128xf32>
    %59 = math.rsqrt %58 : vector<1x128xf32>
    %60 = arith.mulf %6, %59 : vector<1x128xf32>
    %61 = arith.mulf %52, %60 : vector<1x128xf32>
    %62 = arith.subf %7, %61 : vector<1x128xf32>
    %63 = vector.broadcast %60 : vector<1x128xf32> to vector<32x128xf32>
    %64 = arith.mulf %29, %63 : vector<32x128xf32>
    %65 = vector.broadcast %62 : vector<1x128xf32> to vector<32x128xf32>
    %66 = arith.addf %64, %65 : vector<32x128xf32>
    %cst_46 = arith.constant 0.000000e+00 : f32
    %67 = vector.broadcast %cst_46 : f32 to vector<32x128xf32>
    %68 = arith.maximumf %66, %67 : vector<32x128xf32>
    %69 = vector.shape_cast %68 : vector<32x128xf32> to vector<2x16x128xf32>
    %c0_47 = arith.constant 0 : index
    %c1_48 = arith.constant 1 : index
    %c0_49 = arith.constant 0 : index
    %70 = vector.load %arg5[%c0_47, %c1_48, %c0_49] : memref<2x18x128xf32, #tpu.memory_space<vmem>>, vector<2x16x128xf32>
    tpu.vector_store %arg5[%c0_47, %c1_48, %c0_49], %69 {strides = array<i32>} : memref<2x18x128xf32, #tpu.memory_space<vmem>>, vector<2x16x128xf32>,
    %c0_50 = arith.constant 0 : index
    %c0_51 = arith.constant 0 : index
    %c0_52 = arith.constant 0 : index
    %71 = vector.load %arg5[%c0_50, %c0_51, %c0_52] : memref<2x18x128xf32, #tpu.memory_space<vmem>>, vector<2x16x128xf32>
    %72 = vector.shape_cast %71 : vector<2x16x128xf32> to vector<32x128xf32>
    %73 = arith.truncf %72 : vector<32x128xf32> to vector<32x128xbf16>
    %c0_53 = arith.constant 0 : index
    %c0_54 = arith.constant 0 : index
    %c0_55 = arith.constant 0 : index
    %74 = vector.load %arg2[%c0_53, %c0_54, %c0_55] : memref<3x128x128xbf16, #tpu.memory_space<vmem>>, vector<1x128x128xbf16>
    %75 = vector.shape_cast %74 : vector<1x128x128xbf16> to vector<128x128xbf16>
    %cst_56 = arith.constant dense<0.000000e+00> : vector<32x128xf32>
    %76 = tpu.matmul %73, %75, %cst_56 {dimension_numbers = #tpu.dot_dimension_numbers<[1], [0], [0], [1], [0, 0, 1, 1], [], []>} : vector<32x128xbf16>, vector<128x128xbf16>, vector<32x128xf32> -> vector<32x128xf32>
    %c0_57 = arith.constant 0 : index
    %c1_58 = arith.constant 1 : index
    %c0_59 = arith.constant 0 : index
    %77 = vector.load %arg5[%c0_57, %c1_58, %c0_59] : memref<2x18x128xf32, #tpu.memory_space<vmem>>, vector<2x16x128xf32>
    %78 = vector.shape_cast %77 : vector<2x16x128xf32> to vector<32x128xf32>
    %79 = arith.truncf %78 : vector<32x128xf32> to vector<32x128xbf16>
    %c1_60 = arith.constant 1 : index
    %c0_61 = arith.constant 0 : index
    %c0_62 = arith.constant 0 : index
    %80 = vector.load %arg2[%c1_60, %c0_61, %c0_62] : memref<3x128x128xbf16, #tpu.memory_space<vmem>>, vector<1x128x128xbf16>
    %81 = vector.shape_cast %80 : vector<1x128x128xbf16> to vector<128x128xbf16>
    %cst_63 = arith.constant dense<0.000000e+00> : vector<32x128xf32>
    %82 = tpu.matmul %79, %81, %cst_63 {dimension_numbers = #tpu.dot_dimension_numbers<[1], [0], [0], [1], [0, 0, 1, 1], [], []>} : vector<32x128xbf16>, vector<128x128xbf16>, vector<32x128xf32> -> vector<32x128xf32>
    %83 = arith.addf %76, %82 : vector<32x128xf32>
    %c0_64 = arith.constant 0 : index
    %c2_65 = arith.constant 2 : index
    %c0_66 = arith.constant 0 : index
    %84 = vector.load %arg5[%c0_64, %c2_65, %c0_66] : memref<2x18x128xf32, #tpu.memory_space<vmem>>, vector<2x16x128xf32>
    %85 = vector.shape_cast %84 : vector<2x16x128xf32> to vector<32x128xf32>
    %86 = arith.truncf %85 : vector<32x128xf32> to vector<32x128xbf16>
    %c2_67 = arith.constant 2 : index
    %c0_68 = arith.constant 0 : index
    %c0_69 = arith.constant 0 : index
    %87 = vector.load %arg2[%c2_67, %c0_68, %c0_69] : memref<3x128x128xbf16, #tpu.memory_space<vmem>>, vector<1x128x128xbf16>
    %88 = vector.shape_cast %87 : vector<1x128x128xbf16> to vector<128x128xbf16>
    %cst_70 = arith.constant dense<0.000000e+00> : vector<32x128xf32>
    %89 = tpu.matmul %86, %88, %cst_70 {dimension_numbers = #tpu.dot_dimension_numbers<[1], [0], [0], [1], [0, 0, 1, 1], [], []>} : vector<32x128xbf16>, vector<128x128xbf16>, vector<32x128xf32> -> vector<32x128xf32>
    %90 = arith.addf %83, %89 : vector<32x128xf32>
    %cst_71 = arith.constant dense<0.000000e+00> : vector<128xf32>
    %91 = vector.multi_reduction <add>, %90, %cst_71 [0] : vector<32x128xf32> to vector<128xf32>
    %92 = vector.shape_cast %91 : vector<128xf32> to vector<1x128xf32>
    %c64_i32_72 = arith.constant 64 : i32
    %93 = tpu.dynamic_rotate %92 by %c64_i32_72 dim 1 : vector<1x128xf32>, i32 -> vector<1x128xf32>
    %94 = arith.addf %92, %93 : vector<1x128xf32>
    %c32_i32_73 = arith.constant 32 : i32
    %95 = tpu.dynamic_rotate %94 by %c32_i32_73 dim 1 : vector<1x128xf32>, i32 -> vector<1x128xf32>
    %96 = arith.addf %94, %95 : vector<1x128xf32>
    %c16_i32_74 = arith.constant 16 : i32
    %97 = tpu.dynamic_rotate %96 by %c16_i32_74 dim 1 : vector<1x128xf32>, i32 -> vector<1x128xf32>
    %98 = arith.addf %96, %97 : vector<1x128xf32>
    %c8_i32_75 = arith.constant 8 : i32
    %99 = tpu.dynamic_rotate %98 by %c8_i32_75 dim 1 : vector<1x128xf32>, i32 -> vector<1x128xf32>
    %100 = arith.addf %98, %99 : vector<1x128xf32>
    %101 = arith.mulf %90, %90 : vector<32x128xf32>
    %cst_76 = arith.constant dense<0.000000e+00> : vector<128xf32>
    %102 = vector.multi_reduction <add>, %101, %cst_76 [0] : vector<32x128xf32> to vector<128xf32>
    %103 = vector.shape_cast %102 : vector<128xf32> to vector<1x128xf32>
    %c64_i32_77 = arith.constant 64 : i32
    %104 = tpu.dynamic_rotate %103 by %c64_i32_77 dim 1 : vector<1x128xf32>, i32 -> vector<1x128xf32>
    %105 = arith.addf %103, %104 : vector<1x128xf32>
    %c32_i32_78 = arith.constant 32 : i32
    %106 = tpu.dynamic_rotate %105 by %c32_i32_78 dim 1 : vector<1x128xf32>, i32 -> vector<1x128xf32>
    %107 = arith.addf %105, %106 : vector<1x128xf32>
    %c16_i32_79 = arith.constant 16 : i32
    %108 = tpu.dynamic_rotate %107 by %c16_i32_79 dim 1 : vector<1x128xf32>, i32 -> vector<1x128xf32>
    %109 = arith.addf %107, %108 : vector<1x128xf32>
    %c8_i32_80 = arith.constant 8 : i32
    %110 = tpu.dynamic_rotate %109 by %c8_i32_80 dim 1 : vector<1x128xf32>, i32 -> vector<1x128xf32>
    %111 = arith.addf %109, %110 : vector<1x128xf32>
    %cst_81 = arith.constant 0.001953125 : f32
    %112 = vector.broadcast %cst_81 : f32 to vector<1x128xf32>
    %113 = arith.mulf %100, %112 : vector<1x128xf32>
    %cst_82 = arith.constant 0.001953125 : f32
    %114 = vector.broadcast %cst_82 : f32 to vector<1x128xf32>
    %115 = arith.mulf %111, %114 : vector<1x128xf32>
    %116 = arith.mulf %113, %113 : vector<1x128xf32>
    %117 = arith.subf %115, %116 : vector<1x128xf32>
    %cst_83 = arith.constant 9.99999974E-6 : f32
    %118 = vector.broadcast %cst_83 : f32 to vector<1x128xf32>
    %119 = arith.addf %117, %118 : vector<1x128xf32>
    %120 = math.rsqrt %119 : vector<1x128xf32>
    %121 = arith.mulf %8, %120 : vector<1x128xf32>
    %122 = arith.mulf %113, %121 : vector<1x128xf32>
    %123 = arith.subf %9, %122 : vector<1x128xf32>
    %124 = vector.broadcast %121 : vector<1x128xf32> to vector<32x128xf32>
    %125 = arith.mulf %90, %124 : vector<32x128xf32>
    %126 = vector.broadcast %123 : vector<1x128xf32> to vector<32x128xf32>
    %127 = arith.addf %125, %126 : vector<32x128xf32>
    %128 = vector.shape_cast %4 : vector<2x16x128xf32> to vector<32x128xf32>
    %129 = arith.addf %127, %128 : vector<32x128xf32>
    %cst_84 = arith.constant 0.000000e+00 : f32
    %130 = vector.broadcast %cst_84 : f32 to vector<32x128xf32>
    %131 = arith.maximumf %129, %130 : vector<32x128xf32>
    %c0_85 = arith.constant 0 : index
    %c0_86 = arith.constant 0 : index
    %132 = vector.load %arg4[%c0_85, %c0_86] : memref<32x128xf32, #tpu.memory_space<vmem>>, vector<32x128xf32>
    tpu.vector_store %arg4[%c0_85, %c0_86], %131 {strides = array<i32>} : memref<32x128xf32, #tpu.memory_space<vmem>>, vector<32x128xf32>,
    return
  }
}

</mosaic_0001>

<llo_original>
// kernel: tpu_custom_call.1
$region0: #{tpu_custom_call.1}
  #allocation0 [shape = 'u32[]', space=smem, size = 0x4, offset = 0x4, fixed_abs, tag = 'smem constant byte address 0x4 - core index']
  #allocation1 [shape = 'u32[144,128]{1,0:T(1,128)}', space=vmem, size = 0x12000, scoped, tag = 'internal scratch']
  #allocation2 [shape = 'f32[2,18,128]{2,1,0:T(8,128)}', space=vmem, size = 0x6000, scoped, tag = 'scratch operand']
  %s0 = inlined_call_operand.hbm [shape: f32[2,16,128], index: 0, kind: input, shape index: {}]
  %s1 = inlined_call_operand.hbm [shape: bf16[3,128,128], index: 1, kind: input, shape index: {}]
  %s2 = inlined_call_operand.hbm [shape: bf16[3,128,128], index: 2, kind: input, shape index: {}]
  %s3 = inlined_call_operand.vmem [shape: f32[4,128], index: 3, kind: input, shape index: {}]
  %s4 = inlined_call_operand.hbm [shape: f32[32,128], index: 4, kind: output, shape index: {}]
  %s5 = sld [smem:[#allocation0]]
  $region38: #{tpu_custom_call.1} parent=0
    _
  %s7 = ssub.s32 1, %s5
  %s8 = scalar_select 0, %s7, %s5
  $region1: #{tpu_custom_call.1} parent=0
    #allocation3 [shape = 'u8[16384]{0}', space=vmem, size = 0x4000, scoped, tag = 'input window, operand 0, single buffered']
    #allocation4 [shape = 's32[1]{0}', space=sflag, size = 0x4, scoped, tag = 'scoped memory for tpu_custom_call.1']
    #allocation5 [shape = 's32[1]{0}', space=sflag, size = 0x4, scoped, tag = 'scoped memory for tpu_custom_call.1']
    #allocation6 [shape = 'u8[98304]{0}', space=vmem, size = 0x18000, scoped, tag = 'input window, operand 1, single buffered']
    #allocation7 [shape = 's32[1]{0}', space=sflag, size = 0x4, scoped, tag = 'scoped memory for tpu_custom_call.1']
    #allocation8 [shape = 'u8[98304]{0}', space=vmem, size = 0x18000, scoped, tag = 'input window, operand 2, single buffered']
    #allocation9 [shape = 'u8[16384]{0}', space=vmem, size = 0x4000, scoped, tag = 'output window, operand 0, single buffered']
    %9 = vsyncpa [#allocation4], 0
    %10 = vsyncpa [#allocation7], 0
    %11 = vsyncpa [#allocation5], 0
    // Predicated region
    $region2: #{tpu_custom_call.1} parent=1 // pred_check
      _
    $region3: #{tpu_custom_call.1} parent=1 // pred_check_branch
      %13 = sbr.rel (0) target = $region5
    $region4: #{tpu_custom_call.1} parent=1 // pred_region
      %s15 = ssub.s32 512, 512
      %16 = vsyncadd [#allocation4], %s15
      %s17 = sshll.u32 [#allocation3], 4
      %s18 = int_to_ptr.vmem [resolvable:$true] %s17
      %23 = dma.hbm_to_vmem [thread:$0]  %s0, 512, %s18, [#allocation4], 128, 128, 8
    $region5: #{tpu_custom_call.1} parent=1 // pred_fallthru
      _
    // Predicated region
    $region6: #{tpu_custom_call.1} parent=1 // pred_check
      _
    $region7: #{tpu_custom_call.1} parent=1 // pred_check_branch
      %25 = sbr.rel (0) target = $region9
    $region8: #{tpu_custom_call.1} parent=1 // pred_region
      %s27 = ssub.s32 3072, 3072
      %28 = vsyncadd [#allocation7], %s27
      %s29 = sshll.u32 [#allocation6], 4
      %s30 = int_to_ptr.vmem [resolvable:$true] %s29
      %35 = dma.hbm_to_vmem [thread:$0]  %s1, 3072, %s30, [#allocation7], 64, 64, 4
    $region9: #{tpu_custom_call.1} parent=1 // pred_fallthru
      _
    // Predicated region
    $region10: #{tpu_custom_call.1} parent=1 // pred_check
      _
    $region11: #{tpu_custom_call.1} parent=1 // pred_check_branch
      %37 = sbr.rel (0) target = $region13
    $region12: #{tpu_custom_call.1} parent=1 // pred_region
      %s39 = ssub.s32 3072, 3072
      %40 = vsyncadd [#allocation7], %s39
      %s41 = sshll.u32 [#allocation8], 4
      %s42 = int_to_ptr.vmem [resolvable:$true] %s41
      %47 = dma.hbm_to_vmem [thread:$0]  %s2, 3072, %s42, [#allocation7], 64, 64, 4
    $region13: #{tpu_custom_call.1} parent=1 // pred_fallthru
      _
    // Predicated region
    $region14: #{tpu_custom_call.1} parent=1 // pred_check
      _
    $region15: #{tpu_custom_call.1} parent=1 // pred_check_branch
      %49 = sbr.rel (0) target = $region17
    $region16: #{tpu_custom_call.1} parent=1 // pred_region
      _
    $region17: #{tpu_custom_call.1} parent=1 // pred_fallthru
      _
    // Predicated region
    $region18: #{tpu_custom_call.1} parent=1 // pred_check
      _
    $region19: #{tpu_custom_call.1} parent=1 // pred_check_branch
      %51 = sbr.rel (0) target = $region21
    $region20: #{tpu_custom_call.1} parent=1 // pred_region
      %52 = dma.done [#allocation4], 512
    $region21: #{tpu_custom_call.1} parent=1 // pred_fallthru
      _
    // Predicated region
    $region22: #{tpu_custom_call.1} parent=1 // pred_check
      _
    $region23: #{tpu_custom_call.1} parent=1 // pred_check_branch
      %54 = sbr.rel (0) target = $region25
    $region24: #{tpu_custom_call.1} parent=1 // pred_region
      %55 = dma.done [#allocation7], 3072
    $region25: #{tpu_custom_call.1} parent=1 // pred_fallthru
      _
    // Predicated region
    $region26: #{tpu_custom_call.1} parent=1 // pred_check
      _
    $region27: #{tpu_custom_call.1} parent=1 // pred_check_branch
      %57 = sbr.rel (0) target = $region29
    $region28: #{tpu_custom_call.1} parent=1 // pred_region
      %58 = dma.done [#allocation7], 3072
    $region29: #{tpu_custom_call.1} parent=1 // pred_fallthru
      _
    %60 = vst [vmem:[#allocation2] sm:$0x1] 0.0
    %61 = vst [vmem:[#allocation2 + $0x18] sm:$0x1] 0.0
    %62 = vst [vmem:[#allocation2 + $0x11] sm:$0x1] 0.0
    %63 = vst [vmem:[#allocation2 + $0x29] sm:$0x1] 0.0
    %v64 = vld [vmem:[#allocation3] sm:$0xff]
    %v65 = vld [vmem:[#allocation3 + $0x8] sm:$0xff]
    %v66 = vld [vmem:[#allocation3 + $0x10] sm:$0xff]
    %v67 = vld [vmem:[#allocation3 + $0x18] sm:$0xff]
    %68 = vst [vmem:[#allocation2 + $0x1] sm:$0xff] %v64
    %69 = vst [vmem:[#allocation2 + $0x9] sm:$0xff] %v65
    %70 = vst [vmem:[#allocation2 + $0x19] sm:$0xff] %v66
    %71 = vst [vmem:[#allocation2 + $0x21] sm:$0xff] %v67
    %v72 = vld [vmem:[%s3] sm:$0x1]
    %v73 = vld [vmem:[%s3 + $0x1] sm:$0x1]
    %v74 = vld [vmem:[%s3 + $0x2] sm:$0x1]
    %v75 = vld [vmem:[%s3 + $0x3] sm:$0x1]
    %v76 = vld [vmem:[#allocation2] sm:$0xff]
    %v77 = vld [vmem:[#allocation2 + $0x8] sm:$0xff]
    %v78 = vld [vmem:[#allocation2 + $0x18] sm:$0xff]
    %v79 = vld [vmem:[#allocation2 + $0x20] sm:$0xff]
    %v80 = vpack.c.bf16 %v77, %v76
    %v81 = vpack.c.bf16 %v79, %v78
    %v82 = vld [vmem:[#allocation6] sm:$0xf]
    %v83 = vld [vmem:[#allocation6 + $0x4] sm:$0xf]
    %v84 = vld [vmem:[#allocation6 + $0x8] sm:$0xf]
    %v85 = vld [vmem:[#allocation6 + $0xc] sm:$0xf]
    %v86 = vld [vmem:[#allocation6 + $0x10] sm:$0xf]
    %v87 = vld [vmem:[#allocation6 + $0x14] sm:$0xf]
    %v88 = vld [vmem:[#allocation6 + $0x18] sm:$0xf]
    %v89 = vld [vmem:[#allocation6 + $0x1c] sm:$0xf]
    %v90 = vld [vmem:[#allocation6 + $0x20] sm:$0xf]
    %v91 = vld [vmem:[#allocation6 + $0x24] sm:$0xf]
    %v92 = vld [vmem:[#allocation6 + $0x28] sm:$0xf]
    %v93 = vld [vmem:[#allocation6 + $0x2c] sm:$0xf]
    %v94 = vld [vmem:[#allocation6 + $0x30] sm:$0xf]
    %v95 = vld [vmem:[#allocation6 + $0x34] sm:$0xf]
    %v96 = vld [vmem:[#allocation6 + $0x38] sm:$0xf]
    %v97 = vld [vmem:[#allocation6 + $0x3c] sm:$0xf]
    %v98 = vld [vmem:[#allocation2 + $0x1] sm:$0xff]
    %v99 = vld [vmem:[#allocation2 + $0x9] sm:$0xff]
    %v100 = vld [vmem:[#allocation2 + $0x19] sm:$0xff]
    %v101 = vld [vmem:[#allocation2 + $0x21] sm:$0xff]
    %v102 = vpack.c.bf16 %v99, %v98
    %v103 = vpack.c.bf16 %v101, %v100
    %s104 = scalar_lea.vmem [#allocation6], 64
    %v105 = vld [vmem:[%s104] sm:$0xf]
    %v106 = vld [vmem:[%s104 + $0x4] sm:$0xf]
    %v107 = vld [vmem:[%s104 + $0x8] sm:$0xf]
    %v108 = vld [vmem:[%s104 + $0xc] sm:$0xf]
    %v109 = vld [vmem:[%s104 + $0x10] sm:$0xf]
    %v110 = vld [vmem:[%s104 + $0x14] sm:$0xf]
    %v111 = vld [vmem:[%s104 + $0x18] sm:$0xf]
    %v112 = vld [vmem:[%s104 + $0x1c] sm:$0xf]
    %v113 = vld [vmem:[%s104 + $0x20] sm:$0xf]
    %v114 = vld [vmem:[%s104 + $0x24] sm:$0xf]
    %v115 = vld [vmem:[%s104 + $0x28] sm:$0xf]
    %v116 = vld [vmem:[%s104 + $0x2c] sm:$0xf]
    %v117 = vld [vmem:[%s104 + $0x30] sm:$0xf]
    %v118 = vld [vmem:[%s104 + $0x34] sm:$0xf]
    %v119 = vld [vmem:[%s104 + $0x38] sm:$0xf]
    %v120 = vld [vmem:[%s104 + $0x3c] sm:$0xf]
    %v137 = vunpack.c.l.b16 %v105
    %v138 = vunpack.c.l.b16 %v106
    %v139 = vunpack.c.l.b16 %v107
    %v140 = vunpack.c.l.b16 %v108
    %v141 = vunpack.c.l.b16 %v109
    %v142 = vunpack.c.l.b16 %v110
    %v143 = vunpack.c.l.b16 %v111
    %v144 = vunpack.c.l.b16 %v112
    %v145 = vunpack.c.l.b16 %v113
    %v146 = vunpack.c.l.b16 %v114
    %v147 = vunpack.c.l.b16 %v115
    %v148 = vunpack.c.l.b16 %v116
    %v149 = vunpack.c.l.b16 %v117
    %v150 = vunpack.c.l.b16 %v118
    %v151 = vunpack.c.l.b16 %v119
    %v152 = vunpack.c.l.b16 %v120
    %v153 = vpack.c.b16 %v138, %v137
    %v154 = vpack.c.b16 %v140, %v139
    %v155 = vpack.c.b16 %v142, %v141
    %v156 = vpack.c.b16 %v144, %v143
    %v157 = vpack.c.b16 %v146, %v145
    %v158 = vpack.c.b16 %v148, %v147
    %v159 = vpack.c.b16 %v150, %v149
    %v160 = vpack.c.b16 %v152, %v151
    %169 = vmatprep.subr.bf16.mxu0 0
    %170 = vmatpush1.bf16.msra.mxu0 %v153
    %171 = vmatprep.subr.bf16.mxu0 0
    %172 = vmatpush1.bf16.msra.mxu0 %v154
    %173 = vmatprep.subr.bf16.mxu0 0
    %174 = vmatpush1.bf16.msra.mxu0 %v155
    %175 = vmatprep.subr.bf16.mxu0 0
    %176 = vmatpush1.bf16.msra.mxu0 %v156
    %177 = vmatprep.subr.bf16.mxu0 0
    %178 = vmatpush1.bf16.msra.mxu0 %v157
    %179 = vmatprep.subr.bf16.mxu0 0
    %180 = vmatpush1.bf16.msra.mxu0 %v158
    %181 = vmatprep.subr.bf16.mxu0 0
    %182 = vmatpush1.bf16.msra.mxu0 %v159
    %183 = vmatprep.subr.bf16.mxu0 0
    %184 = vmatpush1.bf16.msra.mxu0 %v160
    %185 = vmatprep.subr.bf16.mxu0 0
    %186 = vmatpush1.bf16.msra.mxu0 0
    %187 = vmatprep.subr.bf16.mxu0 0
    %188 = vmatpush1.bf16.msra.mxu0 0
    %189 = vmatprep.subr.bf16.mxu0 0
    %190 = vmatpush1.bf16.msra.mxu0 0
    %191 = vmatprep.subr.bf16.mxu0 0
    %192 = vmatpush1.bf16.msra.mxu0 0
    %193 = vmatprep.subr.bf16.mxu0 0
    %194 = vmatpush1.bf16.msra.mxu0 0
    %195 = vmatprep.subr.bf16.mxu0 0
    %196 = vmatpush1.bf16.msra.mxu0 0
    %197 = vmatprep.subr.bf16.mxu0 0
    %198 = vmatpush1.bf16.msra.mxu0 0
    %199 = vmatprep.subr.bf16.mxu0 0
    %200 = vmatpush1.bf16.msra.mxu0 0
    %201 = vmatprep.mubr.bf16.mxu0 0
    %202 = vmatmul.mubr.bf16.gmra.mrb[0].mxu0 %v102
    %v203 = vpop.f32.mrb[0].mxu0
    %v204 = vadd.f32 0.0, %v203
    %v205 = vpop.f32.mrb[0].mxu0
    %v206 = vpop.f32.mrb[0].mxu0
    %v207 = vadd.f32 0.0, %v206
    %v208 = vpop.f32.mrb[0].mxu0
    %209 = vmatprep.mubr.bf16.mxu0 0
    %210 = vmatmul.mubr.bf16.gmra.mrb[0].mxu0 %v103
    %v211 = vpop.f32.mrb[0].mxu0
    %v212 = vadd.f32 0.0, %v211
    %v213 = vpop.f32.mrb[0].mxu0
    %v214 = vpop.f32.mrb[0].mxu0
    %v215 = vadd.f32 0.0, %v214
    %v216 = vpop.f32.mrb[0].mxu0
    %217 = vdwg.mxu0
    %v234 = vunpack.c.l.b16 %v82
    %v235 = vunpack.c.l.b16 %v83
    %v236 = vunpack.c.l.b16 %v84
    %v237 = vunpack.c.l.b16 %v85
    %v238 = vunpack.c.l.b16 %v86
    %v239 = vunpack.c.l.b16 %v87
    %v240 = vunpack.c.l.b16 %v88
    %v241 = vunpack.c.l.b16 %v89
    %v242 = vunpack.c.l.b16 %v90
    %v243 = vunpack.c.l.b16 %v91
    %v244 = vunpack.c.l.b16 %v92
    %v245 = vunpack.c.l.b16 %v93
    %v246 = vunpack.c.l.b16 %v94
    %v247 = vunpack.c.l.b16 %v95
    %v248 = vunpack.c.l.b16 %v96
    %v249 = vunpack.c.l.b16 %v97
    %v250 = vpack.c.b16 %v235, %v234
    %v251 = vpack.c.b16 %v237, %v236
    %v252 = vpack.c.b16 %v239, %v238
    %v253 = vpack.c.b16 %v241, %v240
    %v254 = vpack.c.b16 %v243, %v242
    %v255 = vpack.c.b16 %v245, %v244
    %v256 = vpack.c.b16 %v247, %v246
    %v257 = vpack.c.b16 %v249, %v248
    %266 = vmatprep.subr.bf16.mxu0 0
    %267 = vmatpush1.bf16.msra.mxu0 %v250
    %268 = vmatprep.subr.bf16.mxu0 0
    %269 = vmatpush1.bf16.msra.mxu0 %v251
    %270 = vmatprep.subr.bf16.mxu0 0
    %271 = vmatpush1.bf16.msra.mxu0 %v252
    %272 = vmatprep.subr.bf16.mxu0 0
    %273 = vmatpush1.bf16.msra.mxu0 %v253
    %274 = vmatprep.subr.bf16.mxu0 0
    %275 = vmatpush1.bf16.msra.mxu0 %v254
    %276 = vmatprep.subr.bf16.mxu0 0
    %277 = vmatpush1.bf16.msra.mxu0 %v255
    %278 = vmatprep.subr.bf16.mxu0 0
    %279 = vmatpush1.bf16.msra.mxu0 %v256
    %280 = vmatprep.subr.bf16.mxu0 0
    %281 = vmatpush1.bf16.msra.mxu0 %v257
    %282 = vmatprep.subr.bf16.mxu0 0
    %283 = vmatpush1.bf16.msra.mxu0 0
    %284 = vmatprep.subr.bf16.mxu0 0
    %285 = vmatpush1.bf16.msra.mxu0 0
    %286 = vmatprep.subr.bf16.mxu0 0
    %287 = vmatpush1.bf16.msra.mxu0 0
    %288 = vmatprep.subr.bf16.mxu0 0
    %289 = vmatpush1.bf16.msra.mxu0 0
    %290 = vmatprep.subr.bf16.mxu0 0
    %291 = vmatpush1.bf16.msra.mxu0 0
    %292 = vmatprep.subr.bf16.mxu0 0
    %293 = vmatpush1.bf16.msra.mxu0 0
    %294 = vmatprep.subr.bf16.mxu0 0
    %295 = vmatpush1.bf16.msra.mxu0 0
    %296 = vmatprep.subr.bf16.mxu0 0
    %297 = vmatpush1.bf16.msra.mxu0 0
    %298 = vmatprep.mubr.bf16.mxu0 0
    %299 = vmatmul.mubr.bf16.gmra.mrb[0].mxu0 %v80
    %v300 = vpop.f32.mrb[0].mxu0
    %v301 = vadd.f32 %v204, %v300
    %v302 = vpop.f32.mrb[0].mxu0
    %v303 = vpop.f32.mrb[0].mxu0
    %v304 = vadd.f32 %v207, %v303
    %v305 = vpop.f32.mrb[0].mxu0
    %306 = vmatprep.mubr.bf16.mxu0 0
    %307 = vmatmul.mubr.bf16.gmra.mrb[0].mxu0 %v81
    %v308 = vpop.f32.mrb[0].mxu0
    %v309 = vadd.f32 %v212, %v308
    %v310 = vpop.f32.mrb[0].mxu0
    %v311 = vpop.f32.mrb[0].mxu0
    %v312 = vadd.f32 %v215, %v311
    %v313 = vpop.f32.mrb[0].mxu0
    %314 = vdwg.mxu0
    %v315 = vld [vmem:[#allocation2 + $0x2] sm:$0xff]
    %v316 = vld [vmem:[#allocation2 + $0xa] sm:$0xff]
    %v317 = vld [vmem:[#allocation2 + $0x1a] sm:$0xff]
    %v318 = vld [vmem:[#allocation2 + $0x22] sm:$0xff]
    %v319 = vpack.c.bf16 %v316, %v315
    %v320 = vpack.c.bf16 %v318, %v317
    %s321 = scalar_lea.vmem [#allocation6], 128
    %v322 = vld [vmem:[%s321] sm:$0xf]
    %v323 = vld [vmem:[%s321 + $0x4] sm:$0xf]
    %v324 = vld [vmem:[%s321 + $0x8] sm:$0xf]
    %v325 = vld [vmem:[%s321 + $0xc] sm:$0xf]
    %v326 = vld [vmem:[%s321 + $0x10] sm:$0xf]
    %v327 = vld [vmem:[%s321 + $0x14] sm:$0xf]
    %v328 = vld [vmem:[%s321 + $0x18] sm:$0xf]
    %v329 = vld [vmem:[%s321 + $0x1c] sm:$0xf]
    %v330 = vld [vmem:[%s321 + $0x20] sm:$0xf]
    %v331 = vld [vmem:[%s321 + $0x24] sm:$0xf]
    %v332 = vld [vmem:[%s321 + $0x28] sm:$0xf]
    %v333 = vld [vmem:[%s321 + $0x2c] sm:$0xf]
    %v334 = vld [vmem:[%s321 + $0x30] sm:$0xf]
    %v335 = vld [vmem:[%s321 + $0x34] sm:$0xf]
    %v336 = vld [vmem:[%s321 + $0x38] sm:$0xf]
    %v337 = vld [vmem:[%s321 + $0x3c] sm:$0xf]
    %v354 = vunpack.c.l.b16 %v322
    %v355 = vunpack.c.l.b16 %v323
    %v356 = vunpack.c.l.b16 %v324
    %v357 = vunpack.c.l.b16 %v325
    %v358 = vunpack.c.l.b16 %v326
    %v359 = vunpack.c.l.b16 %v327
    %v360 = vunpack.c.l.b16 %v328
    %v361 = vunpack.c.l.b16 %v329
    %v362 = vunpack.c.l.b16 %v330
    %v363 = vunpack.c.l.b16 %v331
    %v364 = vunpack.c.l.b16 %v332
    %v365 = vunpack.c.l.b16 %v333
    %v366 = vunpack.c.l.b16 %v334
    %v367 = vunpack.c.l.b16 %v335
    %v368 = vunpack.c.l.b16 %v336
    %v369 = vunpack.c.l.b16 %v337
    %v370 = vpack.c.b16 %v355, %v354
    %v371 = vpack.c.b16 %v357, %v356
    %v372 = vpack.c.b16 %v359, %v358
    %v373 = vpack.c.b16 %v361, %v360
    %v374 = vpack.c.b16 %v363, %v362
    %v375 = vpack.c.b16 %v365, %v364
    %v376 = vpack.c.b16 %v367, %v366
    %v377 = vpack.c.b16 %v369, %v368
    %386 = vmatprep.subr.bf16.mxu0 0
    %387 = vmatpush1.bf16.msra.mxu0 %v370
    %388 = vmatprep.subr.bf16.mxu0 0
    %389 = vmatpush1.bf16.msra.mxu0 %v371
    %390 = vmatprep.subr.bf16.mxu0 0
    %391 = vmatpush1.bf16.msra.mxu0 %v372
    %392 = vmatprep.subr.bf16.mxu0 0
    %393 = vmatpush1.bf16.msra.mxu0 %v373
    %394 = vmatprep.subr.bf16.mxu0 0
    %395 = vmatpush1.bf16.msra.mxu0 %v374
    %396 = vmatprep.subr.bf16.mxu0 0
    %397 = vmatpush1.bf16.msra.mxu0 %v375
    %398 = vmatprep.subr.bf16.mxu0 0
    %399 = vmatpush1.bf16.msra.mxu0 %v376
    %400 = vmatprep.subr.bf16.mxu0 0
    %401 = vmatpush1.bf16.msra.mxu0 %v377
    %402 = vmatprep.subr.bf16.mxu0 0
    %403 = vmatpush1.bf16.msra.mxu0 0
    %404 = vmatprep.subr.bf16.mxu0 0
    %405 = vmatpush1.bf16.msra.mxu0 0
    %406 = vmatprep.subr.bf16.mxu0 0
    %407 = vmatpush1.bf16.msra.mxu0 0
    %408 = vmatprep.subr.bf16.mxu0 0
    %409 = vmatpush1.bf16.msra.mxu0 0
    %410 = vmatprep.subr.bf16.mxu0 0
    %411 = vmatpush1.bf16.msra.mxu0 0
    %412 = vmatprep.subr.bf16.mxu0 0
    %413 = vmatpush1.bf16.msra.mxu0 0
    %414 = vmatprep.subr.bf16.mxu0 0
    %415 = vmatpush1.bf16.msra.mxu0 0
    %416 = vmatprep.subr.bf16.mxu0 0
    %417 = vmatpush1.bf16.msra.mxu0 0
    %418 = vmatprep.mubr.bf16.mxu0 0
    %419 = vmatmul.mubr.bf16.gmra.mrb[0].mxu0 %v319
    %v420 = vpop.f32.mrb[0].mxu0
    %v421 = vadd.f32 0.0, %v420
    %v422 = vpop.f32.mrb[0].mxu0
    %v423 = vpop.f32.mrb[0].mxu0
    %v424 = vadd.f32 0.0, %v423
    %v425 = vpop.f32.mrb[0].mxu0
    %426 = vmatprep.mubr.bf16.mxu0 0
    %427 = vmatmul.mubr.bf16.gmra.mrb[0].mxu0 %v320
    %v428 = vpop.f32.mrb[0].mxu0
    %v429 = vadd.f32 0.0, %v428
    %v430 = vpop.f32.mrb[0].mxu0
    %v431 = vpop.f32.mrb[0].mxu0
    %v432 = vadd.f32 0.0, %v431
    %v433 = vpop.f32.mrb[0].mxu0
    %434 = vdwg.mxu0
    %v435 = vadd.f32 %v301, %v421
    %v436 = vadd.f32 %v304, %v424
    %v437 = vadd.f32 %v309, %v429
    %v438 = vadd.f32 %v312, %v432
    %v439 = vadd.f32 %v435, %v436
    %v440 = vadd.f32 %v439, %v437
    %v441 = vadd.f32 %v440, %v438
    %v442 = vrot.slane %v441, 4
    %v443 = vadd.f32 %v441, %v442
    %v444 = vrot.slane %v443, 2
    %v445 = vadd.f32 %v443, %v444
    %v446 = vrot.slane %v445, 1
    %v447 = vadd.f32 %v445, %v446
    %448 = vrot.lane.b32.xlu0 %v447, 64
    %v449 = vpop.permute.xlu0 %448
    %v450 = vadd.f32 %v447, %v449
    %451 = vrot.lane.b32.xlu0 %v450, 32
    %v452 = vpop.permute.xlu0 %451
    %v453 = vadd.f32 %v450, %v452
    %454 = vrot.lane.b32.xlu0 %v453, 16
    %v455 = vpop.permute.xlu0 %454
    %v456 = vadd.f32 %v453, %v455
    %457 = vrot.lane.b32.xlu0 %v456, 8
    %v458 = vpop.permute.xlu0 %457
    %v459 = vadd.f32 %v456, %v458
    %v460 = vmul.f32 %v435, %v435
    %v461 = vmul.f32 %v436, %v436
    %v462 = vmul.f32 %v437, %v437
    %v463 = vmul.f32 %v438, %v438
    %v464 = vadd.f32 %v460, %v461
    %v465 = vadd.f32 %v464, %v462
    %v466 = vadd.f32 %v465, %v463
    %v467 = vrot.slane %v466, 4
    %v468 = vadd.f32 %v466, %v467
    %v469 = vrot.slane %v468, 2
    %v470 = vadd.f32 %v468, %v469
    %v471 = vrot.slane %v470, 1
    %v472 = vadd.f32 %v470, %v471
    %473 = vrot.lane.b32.xlu0 %v472, 64
    %v474 = vpop.permute.xlu0 %473
    %v475 = vadd.f32 %v472, %v474
    %476 = vrot.lane.b32.xlu0 %v475, 32
    %v477 = vpop.permute.xlu0 %476
    %v478 = vadd.f32 %v475, %v477
    %479 = vrot.lane.b32.xlu0 %v478, 16
    %v480 = vpop.permute.xlu0 %479
    %v481 = vadd.f32 %v478, %v480
    %482 = vrot.lane.b32.xlu0 %v481, 8
    %v483 = vpop.permute.xlu0 %482
    %v484 = vadd.f32 %v481, %v483
    %v485 = vmul.f32 %v459, 0.001953125
    %v486 = vmul.f32 %v484, 0.001953125
    %v487 = vmul.f32 %v485, %v485
    %v488 = vsub.f32 %v486, %v487
    %v489 = vadd.f32 %v488, 1e-05
    %v490 = vrsqrt.pop %v489
    %v491 = vmul.f32 %v72, %v490
    %v492 = vmul.f32 %v485, %v491
    %v493 = vsub.f32 %v73, %v492
    %v494 = vlaneseq
    %v495 = vshrl.u32 %v494, 7
    %v496 = vsub.s32 0, %v495
    %v497 = vrot.slane %v491, %v496
    %v498 = vmul.f32 %v435, %v497
    %v499 = vmul.f32 %v436, %v497
    %v500 = vmul.f32 %v437, %v497
    %v501 = vmul.f32 %v438, %v497
    %v502 = vlaneseq
    %v503 = vshrl.u32 %v502, 7
    %v504 = vsub.s32 0, %v503
    %v505 = vrot.slane %v493, %v504
    %v506 = vadd.f32 %v498, %v505
    %v507 = vadd.f32 %v499, %v505
    %v508 = vadd.f32 %v500, %v505
    %v509 = vadd.f32 %v501, %v505
    %v510 = vmax.f32 %v506, 0.0
    %v511 = vmax.f32 %v507, 0.0
    %v512 = vmax.f32 %v508, 0.0
    %v513 = vmax.f32 %v509, 0.0
    %514 = vst [vmem:[#allocation2 + $0x1] sm:$0xff] %v510
    %515 = vst [vmem:[#allocation2 + $0x9] sm:$0xff] %v511
    %516 = vst [vmem:[#allocation2 + $0x19] sm:$0xff] %v512
    %517 = vst [vmem:[#allocation2 + $0x21] sm:$0xff] %v513
    %v518 = vld [vmem:[#allocation2] sm:$0xff]
    %v519 = vld [vmem:[#allocation2 + $0x8] sm:$0xff]
    %v520 = vld [vmem:[#allocation2 + $0x18] sm:$0xff]
    %v521 = vld [vmem:[#allocation2 + $0x20] sm:$0xff]
    %v522 = vpack.c.bf16 %v519, %v518
    %v523 = vpack.c.bf16 %v521, %v520
    %v524 = vld [vmem:[#allocation8] sm:$0xf]
    %v525 = vld [vmem:[#allocation8 + $0x4] sm:$0xf]
    %v526 = vld [vmem:[#allocation8 + $0x8] sm:$0xf]
    %v527 = vld [vmem:[#allocation8 + $0xc] sm:$0xf]
    %v528 = vld [vmem:[#allocation8 + $0x10] sm:$0xf]
    %v529 = vld [vmem:[#allocation8 + $0x14] sm:$0xf]
    %v530 = vld [vmem:[#allocation8 + $0x18] sm:$0xf]
    %v531 = vld [vmem:[#allocation8 + $0x1c] sm:$0xf]
    %v532 = vld [vmem:[#allocation8 + $0x20] sm:$0xf]
    %v533 = vld [vmem:[#allocation8 + $0x24] sm:$0xf]
    %v534 = vld [vmem:[#allocation8 + $0x28] sm:$0xf]
    %v535 = vld [vmem:[#allocation8 + $0x2c] sm:$0xf]
    %v536 = vld [vmem:[#allocation8 + $0x30] sm:$0xf]
    %v537 = vld [vmem:[#allocation8 + $0x34] sm:$0xf]
    %v538 = vld [vmem:[#allocation8 + $0x38] sm:$0xf]
    %v539 = vld [vmem:[#allocation8 + $0x3c] sm:$0xf]
    %v540 = vld [vmem:[#allocation2 + $0x1] sm:$0xff]
    %v541 = vld [vmem:[#allocation2 + $0x9] sm:$0xff]
    %v542 = vld [vmem:[#allocation2 + $0x19] sm:$0xff]
    %v543 = vld [vmem:[#allocation2 + $0x21] sm:$0xff]
    %v544 = vpack.c.bf16 %v541, %v540
    %v545 = vpack.c.bf16 %v543, %v542
    %s546 = scalar_lea.vmem [#allocation8], 64
    %v547 = vld [vmem:[%s546] sm:$0xf]
    %v548 = vld [vmem:[%s546 + $0x4] sm:$0xf]
    %v549 = vld [vmem:[%s546 + $0x8] sm:$0xf]
    %v550 = vld [vmem:[%s546 + $0xc] sm:$0xf]
    %v551 = vld [vmem:[%s546 + $0x10] sm:$0xf]
    %v552 = vld [vmem:[%s546 + $0x14] sm:$0xf]
    %v553 = vld [vmem:[%s546 + $0x18] sm:$0xf]
    %v554 = vld [vmem:[%s546 + $0x1c] sm:$0xf]
    %v555 = vld [vmem:[%s546 + $0x20] sm:$0xf]
    %v556 = vld [vmem:[%s546 + $0x24] sm:$0xf]
    %v557 = vld [vmem:[%s546 + $0x28] sm:$0xf]
    %v558 = vld [vmem:[%s546 + $0x2c] sm:$0xf]
    %v559 = vld [vmem:[%s546 + $0x30] sm:$0xf]
    %v560 = vld [vmem:[%s546 + $0x34] sm:$0xf]
    %v561 = vld [vmem:[%s546 + $0x38] sm:$0xf]
    %v562 = vld [vmem:[%s546 + $0x3c] sm:$0xf]
    %v579 = vunpack.c.l.b16 %v547
    %v580 = vunpack.c.l.b16 %v548
    %v581 = vunpack.c.l.b16 %v549
    %v582 = vunpack.c.l.b16 %v550
    %v583 = vunpack.c.l.b16 %v551
    %v584 = vunpack.c.l.b16 %v552
    %v585 = vunpack.c.l.b16 %v553
    %v586 = vunpack.c.l.b16 %v554
    %v587 = vunpack.c.l.b16 %v555
    %v588 = vunpack.c.l.b16 %v556
    %v589 = vunpack.c.l.b16 %v557
    %v590 = vunpack.c.l.b16 %v558
    %v591 = vunpack.c.l.b16 %v559
    %v592 = vunpack.c.l.b16 %v560
    %v593 = vunpack.c.l.b16 %v561
    %v594 = vunpack.c.l.b16 %v562
    %v595 = vpack.c.b16 %v580, %v579
    %v596 = vpack.c.b16 %v582, %v581
    %v597 = vpack.c.b16 %v584, %v583
    %v598 = vpack.c.b16 %v586, %v585
    %v599 = vpack.c.b16 %v588, %v587
    %v600 = vpack.c.b16 %v590, %v589
    %v601 = vpack.c.b16 %v592, %v591
    %v602 = vpack.c.b16 %v594, %v593
    %611 = vmatprep.subr.bf16.mxu0 0
    %612 = vmatpush1.bf16.msra.mxu0 %v595
    %613 = vmatprep.subr.bf16.mxu0 0
    %614 = vmatpush1.bf16.msra.mxu0 %v596
    %615 = vmatprep.subr.bf16.mxu0 0
    %616 = vmatpush1.bf16.msra.mxu0 %v597
    %617 = vmatprep.subr.bf16.mxu0 0
    %618 = vmatpush1.bf16.msra.mxu0 %v598
    %619 = vmatprep.subr.bf16.mxu0 0
    %620 = vmatpush1.bf16.msra.mxu0 %v599
    %621 = vmatprep.subr.bf16.mxu0 0
    %622 = vmatpush1.bf16.msra.mxu0 %v600
    %623 = vmatprep.subr.bf16.mxu0 0
    %624 = vmatpush1.bf16.msra.mxu0 %v601
    %625 = vmatprep.subr.bf16.mxu0 0
    %626 = vmatpush1.bf16.msra.mxu0 %v602
    %627 = vmatprep.subr.bf16.mxu0 0
    %628 = vmatpush1.bf16.msra.mxu0 0
    %629 = vmatprep.subr.bf16.mxu0 0
    %630 = vmatpush1.bf16.msra.mxu0 0
    %631 = vmatprep.subr.bf16.mxu0 0
    %632 = vmatpush1.bf16.msra.mxu0 0
    %633 = vmatprep.subr.bf16.mxu0 0
    %634 = vmatpush1.bf16.msra.mxu0 0
    %635 = vmatprep.subr.bf16.mxu0 0
    %636 = vmatpush1.bf16.msra.mxu0 0
    %637 = vmatprep.subr.bf16.mxu0 0
    %638 = vmatpush1.bf16.msra.mxu0 0
    %639 = vmatprep.subr.bf16.mxu0 0
    %640 = vmatpush1.bf16.msra.mxu0 0
    %641 = vmatprep.subr.bf16.mxu0 0
    %642 = vmatpush1.bf16.msra.mxu0 0
    %643 = vmatprep.mubr.bf16.mxu0 0
    %644 = vmatmul.mubr.bf16.gmra.mrb[0].mxu0 %v544
    %v645 = vpop.f32.mrb[0].mxu0
    %v646 = vadd.f32 0.0, %v645
    %v647 = vpop.f32.mrb[0].mxu0
    %v648 = vpop.f32.mrb[0].mxu0
    %v649 = vadd.f32 0.0, %v648
    %v650 = vpop.f32.mrb[0].mxu0
    %651 = vmatprep.mubr.bf16.mxu0 0
    %652 = vmatmul.mubr.bf16.gmra.mrb[0].mxu0 %v545
    %v653 = vpop.f32.mrb[0].mxu0
    %v654 = vadd.f32 0.0, %v653
    %v655 = vpop.f32.mrb[0].mxu0
    %v656 = vpop.f32.mrb[0].mxu0
    %v657 = vadd.f32 0.0, %v656
    %v658 = vpop.f32.mrb[0].mxu0
    %659 = vdwg.mxu0
    %v676 = vunpack.c.l.b16 %v524
    %v677 = vunpack.c.l.b16 %v525
    %v678 = vunpack.c.l.b16 %v526
    %v679 = vunpack.c.l.b16 %v527
    %v680 = vunpack.c.l.b16 %v528
    %v681 = vunpack.c.l.b16 %v529
    %v682 = vunpack.c.l.b16 %v530
    %v683 = vunpack.c.l.b16 %v531
    %v684 = vunpack.c.l.b16 %v532
    %v685 = vunpack.c.l.b16 %v533
    %v686 = vunpack.c.l.b16 %v534
    %v687 = vunpack.c.l.b16 %v535
    %v688 = vunpack.c.l.b16 %v536
    %v689 = vunpack.c.l.b16 %v537
    %v690 = vunpack.c.l.b16 %v538
    %v691 = vunpack.c.l.b16 %v539
    %v692 = vpack.c.b16 %v677, %v676
    %v693 = vpack.c.b16 %v679, %v678
    %v694 = vpack.c.b16 %v681, %v680
    %v695 = vpack.c.b16 %v683, %v682
    %v696 = vpack.c.b16 %v685, %v684
    %v697 = vpack.c.b16 %v687, %v686
    %v698 = vpack.c.b16 %v689, %v688
    %v699 = vpack.c.b16 %v691, %v690
    %708 = vmatprep.subr.bf16.mxu0 0
    %709 = vmatpush1.bf16.msra.mxu0 %v692
    %710 = vmatprep.subr.bf16.mxu0 0
    %711 = vmatpush1.bf16.msra.mxu0 %v693
    %712 = vmatprep.subr.bf16.mxu0 0
    %713 = vmatpush1.bf16.msra.mxu0 %v694
    %714 = vmatprep.subr.bf16.mxu0 0
    %715 = vmatpush1.bf16.msra.mxu0 %v695
    %716 = vmatprep.subr.bf16.mxu0 0
    %717 = vmatpush1.bf16.msra.mxu0 %v696
    %718 = vmatprep.subr.bf16.mxu0 0
    %719 = vmatpush1.bf16.msra.mxu0 %v697
    %720 = vmatprep.subr.bf16.mxu0 0
    %721 = vmatpush1.bf16.msra.mxu0 %v698
    %722 = vmatprep.subr.bf16.mxu0 0
    %723 = vmatpush1.bf16.msra.mxu0 %v699
    %724 = vmatprep.subr.bf16.mxu0 0
    %725 = vmatpush1.bf16.msra.mxu0 0
    %726 = vmatprep.subr.bf16.mxu0 0
    %727 = vmatpush1.bf16.msra.mxu0 0
    %728 = vmatprep.subr.bf16.mxu0 0
    %729 = vmatpush1.bf16.msra.mxu0 0
    %730 = vmatprep.subr.bf16.mxu0 0
    %731 = vmatpush1.bf16.msra.mxu0 0
    %732 = vmatprep.subr.bf16.mxu0 0
    %733 = vmatpush1.bf16.msra.mxu0 0
    %734 = vmatprep.subr.bf16.mxu0 0
    %735 = vmatpush1.bf16.msra.mxu0 0
    %736 = vmatprep.subr.bf16.mxu0 0
    %737 = vmatpush1.bf16.msra.mxu0 0
    %738 = vmatprep.subr.bf16.mxu0 0
    %739 = vmatpush1.bf16.msra.mxu0 0
    %740 = vmatprep.mubr.bf16.mxu0 0
    %741 = vmatmul.mubr.bf16.gmra.mrb[0].mxu0 %v522
    %v742 = vpop.f32.mrb[0].mxu0
    %v743 = vadd.f32 %v646, %v742
    %v744 = vpop.f32.mrb[0].mxu0
    %v745 = vpop.f32.mrb[0].mxu0
    %v746 = vadd.f32 %v649, %v745
    %v747 = vpop.f32.mrb[0].mxu0
    %748 = vmatprep.mubr.bf16.mxu0 0
    %749 = vmatmul.mubr.bf16.gmra.mrb[0].mxu0 %v523
    %v750 = vpop.f32.mrb[0].mxu0
    %v751 = vadd.f32 %v654, %v750
    %v752 = vpop.f32.mrb[0].mxu0
    %v753 = vpop.f32.mrb[0].mxu0
    %v754 = vadd.f32 %v657, %v753
    %v755 = vpop.f32.mrb[0].mxu0
    %756 = vdwg.mxu0
    %v757 = vld [vmem:[#allocation2 + $0x2] sm:$0xff]
    %v758 = vld [vmem:[#allocation2 + $0xa] sm:$0xff]
    %v759 = vld [vmem:[#allocation2 + $0x1a] sm:$0xff]
    %v760 = vld [vmem:[#allocation2 + $0x22] sm:$0xff]
    %v761 = vpack.c.bf16 %v758, %v757
    %v762 = vpack.c.bf16 %v760, %v759
    %s763 = scalar_lea.vmem [#allocation8], 128
    %v764 = vld [vmem:[%s763] sm:$0xf]
    %v765 = vld [vmem:[%s763 + $0x4] sm:$0xf]
    %v766 = vld [vmem:[%s763 + $0x8] sm:$0xf]
    %v767 = vld [vmem:[%s763 + $0xc] sm:$0xf]
    %v768 = vld [vmem:[%s763 + $0x10] sm:$0xf]
    %v769 = vld [vmem:[%s763 + $0x14] sm:$0xf]
    %v770 = vld [vmem:[%s763 + $0x18] sm:$0xf]
    %v771 = vld [vmem:[%s763 + $0x1c] sm:$0xf]
    %v772 = vld [vmem:[%s763 + $0x20] sm:$0xf]
    %v773 = vld [vmem:[%s763 + $0x24] sm:$0xf]
    %v774 = vld [vmem:[%s763 + $0x28] sm:$0xf]
    %v775 = vld [vmem:[%s763 + $0x2c] sm:$0xf]
    %v776 = vld [vmem:[%s763 + $0x30] sm:$0xf]
    %v777 = vld [vmem:[%s763 + $0x34] sm:$0xf]
    %v778 = vld [vmem:[%s763 + $0x38] sm:$0xf]
    %v779 = vld [vmem:[%s763 + $0x3c] sm:$0xf]
    %v796 = vunpack.c.l.b16 %v764
    %v797 = vunpack.c.l.b16 %v765
    %v798 = vunpack.c.l.b16 %v766
    %v799 = vunpack.c.l.b16 %v767
    %v800 = vunpack.c.l.b16 %v768
    %v801 = vunpack.c.l.b16 %v769
    %v802 = vunpack.c.l.b16 %v770
    %v803 = vunpack.c.l.b16 %v771
    %v804 = vunpack.c.l.b16 %v772
    %v805 = vunpack.c.l.b16 %v773
    %v806 = vunpack.c.l.b16 %v774
    %v807 = vunpack.c.l.b16 %v775
    %v808 = vunpack.c.l.b16 %v776
    %v809 = vunpack.c.l.b16 %v777
    %v810 = vunpack.c.l.b16 %v778
    %v811 = vunpack.c.l.b16 %v779
    %v812 = vpack.c.b16 %v797, %v796
    %v813 = vpack.c.b16 %v799, %v798
    %v814 = vpack.c.b16 %v801, %v800
    %v815 = vpack.c.b16 %v803, %v802
    %v816 = vpack.c.b16 %v805, %v804
    %v817 = vpack.c.b16 %v807, %v806
    %v818 = vpack.c.b16 %v809, %v808
    %v819 = vpack.c.b16 %v811, %v810
    %828 = vmatprep.subr.bf16.mxu0 0
    %829 = vmatpush1.bf16.msra.mxu0 %v812
    %830 = vmatprep.subr.bf16.mxu0 0
    %831 = vmatpush1.bf16.msra.mxu0 %v813
    %832 = vmatprep.subr.bf16.mxu0 0
    %833 = vmatpush1.bf16.msra.mxu0 %v814
    %834 = vmatprep.subr.bf16.mxu0 0
    %835 = vmatpush1.bf16.msra.mxu0 %v815
    %836 = vmatprep.subr.bf16.mxu0 0
    %837 = vmatpush1.bf16.msra.mxu0 %v816
    %838 = vmatprep.subr.bf16.mxu0 0
    %839 = vmatpush1.bf16.msra.mxu0 %v817
    %840 = vmatprep.subr.bf16.mxu0 0
    %841 = vmatpush1.bf16.msra.mxu0 %v818
    %842 = vmatprep.subr.bf16.mxu0 0
    %843 = vmatpush1.bf16.msra.mxu0 %v819
    %844 = vmatprep.subr.bf16.mxu0 0
    %845 = vmatpush1.bf16.msra.mxu0 0
    %846 = vmatprep.subr.bf16.mxu0 0
    %847 = vmatpush1.bf16.msra.mxu0 0
    %848 = vmatprep.subr.bf16.mxu0 0
    %849 = vmatpush1.bf16.msra.mxu0 0
    %850 = vmatprep.subr.bf16.mxu0 0
    %851 = vmatpush1.bf16.msra.mxu0 0
    %852 = vmatprep.subr.bf16.mxu0 0
    %853 = vmatpush1.bf16.msra.mxu0 0
    %854 = vmatprep.subr.bf16.mxu0 0
    %855 = vmatpush1.bf16.msra.mxu0 0
    %856 = vmatprep.subr.bf16.mxu0 0
    %857 = vmatpush1.bf16.msra.mxu0 0
    %858 = vmatprep.subr.bf16.mxu0 0
    %859 = vmatpush1.bf16.msra.mxu0 0
    %860 = vmatprep.mubr.bf16.mxu0 0
    %861 = vmatmul.mubr.bf16.gmra.mrb[0].mxu0 %v761
    %v862 = vpop.f32.mrb[0].mxu0
    %v863 = vadd.f32 0.0, %v862
    %v864 = vpop.f32.mrb[0].mxu0
    %v865 = vpop.f32.mrb[0].mxu0
    %v866 = vadd.f32 0.0, %v865
    %v867 = vpop.f32.mrb[0].mxu0
    %868 = vmatprep.mubr.bf16.mxu0 0
    %869 = vmatmul.mubr.bf16.gmra.mrb[0].mxu0 %v762
    %v870 = vpop.f32.mrb[0].mxu0
    %v871 = vadd.f32 0.0, %v870
    %v872 = vpop.f32.mrb[0].mxu0
    %v873 = vpop.f32.mrb[0].mxu0
    %v874 = vadd.f32 0.0, %v873
    %v875 = vpop.f32.mrb[0].mxu0
    %876 = vdwg.mxu0
    %v877 = vadd.f32 %v743, %v863
    %v878 = vadd.f32 %v746, %v866
    %v879 = vadd.f32 %v751, %v871
    %v880 = vadd.f32 %v754, %v874
    %v881 = vadd.f32 %v877, %v878
    %v882 = vadd.f32 %v881, %v879
    %v883 = vadd.f32 %v882, %v880
    %v884 = vrot.slane %v883, 4
    %v885 = vadd.f32 %v883, %v884
    %v886 = vrot.slane %v885, 2
    %v887 = vadd.f32 %v885, %v886
    %v888 = vrot.slane %v887, 1
    %v889 = vadd.f32 %v887, %v888
    %890 = vrot.lane.b32.xlu0 %v889, 64
    %v891 = vpop.permute.xlu0 %890
    %v892 = vadd.f32 %v889, %v891
    %893 = vrot.lane.b32.xlu0 %v892, 32
    %v894 = vpop.permute.xlu0 %893
    %v895 = vadd.f32 %v892, %v894
    %896 = vrot.lane.b32.xlu0 %v895, 16
    %v897 = vpop.permute.xlu0 %896
    %v898 = vadd.f32 %v895, %v897
    %899 = vrot.lane.b32.xlu0 %v898, 8
    %v900 = vpop.permute.xlu0 %899
    %v901 = vadd.f32 %v898, %v900
    %v902 = vmul.f32 %v877, %v877
    %v903 = vmul.f32 %v878, %v878
    %v904 = vmul.f32 %v879, %v879
    %v905 = vmul.f32 %v880, %v880
    %v906 = vadd.f32 %v902, %v903
    %v907 = vadd.f32 %v906, %v904
    %v908 = vadd.f32 %v907, %v905
    %v909 = vrot.slane %v908, 4
    %v910 = vadd.f32 %v908, %v909
    %v911 = vrot.slane %v910, 2
    %v912 = vadd.f32 %v910, %v911
    %v913 = vrot.slane %v912, 1
    %v914 = vadd.f32 %v912, %v913
    %915 = vrot.lane.b32.xlu0 %v914, 64
    %v916 = vpop.permute.xlu0 %915
    %v917 = vadd.f32 %v914, %v916
    %918 = vrot.lane.b32.xlu0 %v917, 32
    %v919 = vpop.permute.xlu0 %918
    %v920 = vadd.f32 %v917, %v919
    %921 = vrot.lane.b32.xlu0 %v920, 16
    %v922 = vpop.permute.xlu0 %921
    %v923 = vadd.f32 %v920, %v922
    %924 = vrot.lane.b32.xlu0 %v923, 8
    %v925 = vpop.permute.xlu0 %924
    %v926 = vadd.f32 %v923, %v925
    %v927 = vmul.f32 %v901, 0.001953125
    %v928 = vmul.f32 %v926, 0.001953125
    %v929 = vmul.f32 %v927, %v927
    %v930 = vsub.f32 %v928, %v929
    %v931 = vadd.f32 %v930, 1e-05
    %v932 = vrsqrt.pop %v931
    %v933 = vmul.f32 %v74, %v932
    %v934 = vmul.f32 %v927, %v933
    %v935 = vsub.f32 %v75, %v934
    %v936 = vlaneseq
    %v937 = vshrl.u32 %v936, 7
    %v938 = vsub.s32 0, %v937
    %v939 = vrot.slane %v933, %v938
    %v940 = vmul.f32 %v877, %v939
    %v941 = vmul.f32 %v878, %v939
    %v942 = vmul.f32 %v879, %v939
    %v943 = vmul.f32 %v880, %v939
    %v944 = vlaneseq
    %v945 = vshrl.u32 %v944, 7
    %v946 = vsub.s32 0, %v945
    %v947 = vrot.slane %v935, %v946
    %v948 = vadd.f32 %v940, %v947
    %v949 = vadd.f32 %v941, %v947
    %v950 = vadd.f32 %v942, %v947
    %v951 = vadd.f32 %v943, %v947
    %v952 = vadd.f32 %v948, %v64
    %v953 = vadd.f32 %v949, %v65
    %v954 = vadd.f32 %v950, %v66
    %v955 = vadd.f32 %v951, %v67
    %v956 = vmax.f32 %v952, 0.0
    %v957 = vmax.f32 %v953, 0.0
    %v958 = vmax.f32 %v954, 0.0
    %v959 = vmax.f32 %v955, 0.0
    %960 = vst [vmem:[#allocation9] sm:$0xff] %v956
    %961 = vst [vmem:[#allocation9 + $0x8] sm:$0xff] %v957
    %962 = vst [vmem:[#allocation9 + $0x10] sm:$0xff] %v958
    %963 = vst [vmem:[#allocation9 + $0x18] sm:$0xff] %v959
    // Predicated region
    $region30: #{tpu_custom_call.1} parent=1 // pred_check
      _
    $region31: #{tpu_custom_call.1} parent=1 // pred_check_branch
      %965 = sbr.rel (0) target = $region33
    $region32: #{tpu_custom_call.1} parent=1 // pred_region
      %s967 = ssub.s32 512, 512
      %968 = vsyncadd [#allocation5], %s967
      %s969 = sshll.u32 [#allocation9], 4
      %s970 = int_to_ptr.vmem [resolvable:$true] %s969
      %975 = dma.vmem_to_hbm [thread:$0]  %s970, 512, %s4, [#allocation5], 128, 128, 8
    $region33: #{tpu_custom_call.1} parent=1 // pred_fallthru
      _
    // Predicated region
    $region34: #{tpu_custom_call.1} parent=1 // pred_check
      _
    $region35: #{tpu_custom_call.1} parent=1 // pred_check_branch
      %977 = sbr.rel (0) target = $region37
    $region36: #{tpu_custom_call.1} parent=1 // pred_region
      %978 = dma.done [#allocation5], 512
    $region37: #{tpu_custom_call.1} parent=1 // pred_fallthru
      _
    %979 = vsyncpa [#allocation4], 1
    %980 = vsyncpa [#allocation7], 1
    %981 = vsyncpa [#allocation5], 1

</llo_original>
